<compile_context>
chip_gen: v6e
topology: v6e:2x2x1
jax: 0.10.0
libtpu: 0.0.40
codegen_flags: <defaults>
</compile_context>

<pallas_src>
import functools
import math

import jax
import jax.numpy as jnp
from jax.experimental import pallas as pl
from jax.experimental.pallas import tpu as pltpu


# ----------------------------- Pallas kernel ------------------------------ #

def _actor_rnn_kernel(T, H, G, hidden_dim, out_dim, max_action, layout,
                      state_ref, w_ref, out_ref):
    """Single-block kernel: whole RNN + trunk hot path.

    state_ref : (B, T*H + G)  raw module input (no wrapper-side reshuffle)
    w_ref     : (R, C)        packed weight slab (see prepare_params for layout)
    out_ref   : (B, out_dim)
    """
    f32 = jnp.float32
    B = state_ref.shape[0]
    TH = T * H

    def wslice(name):
        r, m, n = layout[name]
        return w_ref[r:r + m, :n]

    rb = layout["bias"][0]

    def bias(row, n):
        return w_ref[rb + row:rb + row + 1, :n]   # (1, n), broadcasts over batch

    obs_flat = state_ref[:, :TH]            # (B, T*H), original frame order
    goal = state_ref[:, TH:TH + G]          # (B, G)

    # Layer-0 input projection for ALL frames in one matmul via a block-diagonal
    # weight built at init: pre_all[:, f*H:(f+1)*H] == frame_f @ Wih0^T.
    pre_all = jnp.dot(obs_flat, wslice("w_ih0_big"),
                      preferred_element_type=f32)                  # (B, T*H)

    w_rec = wslice("w_rec")                 # (2H, 2H) blockdiag(Whh0^T, Whh1^T)
    wih1 = wslice("wih1")                   # (H, H)
    b0 = bias(0, H)
    b1r = bias(1, H)

    # Unrolled recurrence.  `.flip(1)` is reproduced by consuming original
    # frames in reverse order (step t uses frame T-1-t); hidden starts at 0.
    hcat = jnp.zeros((B, 2 * H), f32)       # [h0 | h1]
    h1 = jnp.zeros((B, H), f32)
    for t in range(T):
        frame = T - 1 - t
        x_proj = pre_all[:, frame * H:(frame + 1) * H]
        if t == 0:
            rec0 = jnp.zeros((B, H), f32)
            rec1 = jnp.zeros((B, H), f32)
        else:
            rec = jnp.dot(hcat, w_rec, preferred_element_type=f32)  # (B, 2H)
            rec0 = rec[:, :H]
            rec1 = rec[:, H:]
        h0 = jnp.tanh(x_proj + rec0 + b0)
        h1 = jnp.tanh(jnp.dot(h0, wih1, preferred_element_type=f32) + rec1 + b1r)
        hcat = jnp.concatenate([h0, h1], axis=-1)

    # Trunk: concat([h1, goal]) @ W1 computed as h1 @ W1[:H] + goal @ W1[H:]
    # (split done once at init) to avoid an in-kernel concat with the goal.
    z = (jnp.dot(h1, wslice("w1h"), preferred_element_type=f32)
         + jnp.dot(goal, wslice("w1g"), preferred_element_type=f32)
         + bias(2, hidden_dim))
    z = jnp.maximum(z, 0.0)
    z = jnp.dot(z, wslice("w2"), preferred_element_type=f32) + bias(3, hidden_dim)
    z = jnp.maximum(z, 0.0)
    a = jnp.dot(z, wslice("w3"), preferred_element_type=f32) + bias(4, out_dim)

    out_ref[...] = (max_action * jnp.tanh(a)).astype(out_ref.dtype)


# -------------------- one-time parameter preparation ----------------------- #

def _pad_rows(n):
    return ((n + 7) // 8) * 8


def prepare_params(params, *, obs_dim, goal_dim, out_dim, hidden_dim, time_frame):
    """One-time prep: transpose PyTorch (out,in) weights, fuse biases, build the
    block-diagonal fused weights, and pack everything into ONE f32 slab
    (each block starts at a row multiple of 8).  Returns (slab, layout, meta)
    where layout maps name -> (row_start, rows, cols) as static Python ints."""
    T = time_frame
    assert obs_dim % T == 0
    H = obs_dim // T
    G = goal_dim
    TH = T * H
    f32 = jnp.float32

    wih0_t = params["rnn_wih0"].T.astype(f32)          # (H, H)
    whh0_t = params["rnn_whh0"].T.astype(f32)
    wih1_t = params["rnn_wih1"].T.astype(f32)
    whh1_t = params["rnn_whh1"].T.astype(f32)
    b0 = (params["rnn_bih0"] + params["rnn_bhh0"]).astype(f32)     # (H,)
    b1r = (params["rnn_bih1"] + params["rnn_bhh1"]).astype(f32)    # (H,)

    # Block-diagonal layer-0 input projection: one matmul projects every frame.
    w_ih0_big = jnp.kron(jnp.eye(T, dtype=f32), wih0_t)            # (TH, TH)
    # Block-diagonal recurrent weight: both layers' h @ Whh in one matmul.
    w_rec = jax.scipy.linalg.block_diag(whh0_t, whh1_t)            # (2H, 2H)

    w1_t = params["w1"].T.astype(f32)                  # (H+G, hidden)
    w1h, w1g = w1_t[:H], w1_t[H:]
    w2_t = params["w2"].T.astype(f32)                  # (hidden, hidden)
    w3_t = params["w3"].T.astype(f32)                  # (hidden, out)

    C = max(TH, 2 * H, hidden_dim, out_dim)

    blocks = [
        ("w_ih0_big", w_ih0_big),
        ("w_rec", w_rec),
        ("wih1", wih1_t),
        ("w1h", w1h),
        ("w1g", w1g),
        ("w2", w2_t),
        ("w3", w3_t),
    ]

    rows, layout, r = [], {}, 0
    for name, mat in blocks:
        m, n = int(mat.shape[0]), int(mat.shape[1])
        mp = _pad_rows(m)
        rows.append(jnp.zeros((mp, C), f32).at[:m, :n].set(mat))
        layout[name] = (r, m, n)
        r += mp

    # Bias block: one sublane row per bias vector.
    bias_block = jnp.zeros((8, C), f32)
    bias_block = bias_block.at[0, :H].set(b0)
    bias_block = bias_block.at[1, :H].set(b1r)
    bias_block = bias_block.at[2, :hidden_dim].set(params["b1"].astype(f32))
    bias_block = bias_block.at[3, :hidden_dim].set(params["b2"].astype(f32))
    bias_block = bias_block.at[4, :out_dim].set(params["b3"].astype(f32))
    rows.append(bias_block)
    layout["bias"] = (r, 8, C)
    r += 8

    slab = jnp.concatenate(rows, axis=0)               # (R, C)
    meta = dict(obs_dim=obs_dim, goal_dim=G, out_dim=out_dim,
                hidden_dim=hidden_dim, time_frame=T, H=H)
    return slab, layout, meta


# ------------------------------ JAX wrapper -------------------------------- #

def deterministic_actor_rnn_forward(state, prepared, *, max_action=1.0):
    """Hot-path forward: no per-call preprocessing; just state + packed slab
    into one single-block pallas_call (2 input DMAs, 1 output DMA)."""
    slab, layout, meta = prepared
    B = state.shape[0]
    assert state.shape[1] == meta["obs_dim"] + meta["goal_dim"]

    kernel = functools.partial(
        _actor_rnn_kernel,
        meta["time_frame"], meta["H"], meta["goal_dim"],
        meta["hidden_dim"], meta["out_dim"], max_action, layout)

    vmem = pl.BlockSpec(memory_space=pltpu.MemorySpace.VMEM)
    return pl.pallas_call(
        kernel,
        out_shape=jax.ShapeDtypeStruct((B, meta["out_dim"]), jnp.float32),
        in_specs=[vmem, vmem],
        out_specs=vmem,
    )(state, slab)


# --------------------------- parameter creation ----------------------------- #

def init_params(key, obs_per_frame, goal_dim, out_dim, hidden_dim):
    """Deterministic synthetic parameters matching the PyTorch module's shapes
    (PyTorch (out, in) layout, uniform(-1/sqrt(fan_in), 1/sqrt(fan_in)))."""
    H, G = obs_per_frame, goal_dim
    keys = jax.random.split(key, 14)

    def unif(k, shape, fan_in):
        b = 1.0 / math.sqrt(fan_in)
        return jax.random.uniform(k, shape, jnp.float32, -b, b)

    return {
        # nn.RNN, 2 layers, input_size == hidden_size == H
        "rnn_wih0": unif(keys[0], (H, H), H),
        "rnn_whh0": unif(keys[1], (H, H), H),
        "rnn_bih0": unif(keys[2], (H,), H),
        "rnn_bhh0": unif(keys[3], (H,), H),
        "rnn_wih1": unif(keys[4], (H, H), H),
        "rnn_whh1": unif(keys[5], (H, H), H),
        "rnn_bih1": unif(keys[6], (H,), H),
        "rnn_bhh1": unif(keys[7], (H,), H),
        # MLP trunk
        "w1": unif(keys[8], (hidden_dim, H + G), H + G),
        "b1": unif(keys[9], (hidden_dim,), H + G),
        "w2": unif(keys[10], (hidden_dim, hidden_dim), hidden_dim),
        "b2": unif(keys[11], (hidden_dim,), hidden_dim),
        "w3": unif(keys[12], (out_dim, hidden_dim), hidden_dim),
        "b3": unif(keys[13], (out_dim,), hidden_dim),
    }


# ------------------------------ reference ---------------------------------- #

def reference_forward(state, params, *, obs_dim, goal_dim, out_dim,
                      time_frame, max_action=1.0):
    """Pure-JAX reference mirroring the PyTorch forward, with uniform HIGHEST
    matmul precision (fp32 baseline).  The Pallas kernel uses the TPU default
    matmul precision, hence the small tolerance in the check."""
    B = state.shape[0]
    H = obs_dim // time_frame
    hp = jax.lax.Precision.HIGHEST

    obs = state[:, :obs_dim].reshape(B, time_frame, H)[:, ::-1, :]
    goal = state[:, obs_dim:obs_dim + goal_dim]

    h0 = jnp.zeros((B, H), jnp.float32)
    h1 = jnp.zeros((B, H), jnp.float32)
    for t in range(time_frame):
        x_t = obs[:, t, :]
        h0 = jnp.tanh(jnp.dot(x_t, params["rnn_wih0"].T, precision=hp)
                      + params["rnn_bih0"]
                      + jnp.dot(h0, params["rnn_whh0"].T, precision=hp)
                      + params["rnn_bhh0"])
        h1 = jnp.tanh(jnp.dot(h0, params["rnn_wih1"].T, precision=hp)
                      + params["rnn_bih1"]
                      + jnp.dot(h1, params["rnn_whh1"].T, precision=hp)
                      + params["rnn_bhh1"])

    combined = jnp.concatenate([h1, goal], axis=1)
    z = jnp.maximum(jnp.dot(combined, params["w1"].T, precision=hp) + params["b1"], 0.0)
    z = jnp.maximum(jnp.dot(z, params["w2"].T, precision=hp) + params["b2"], 0.0)
    a = jnp.dot(z, params["w3"].T, precision=hp) + params["b3"]
    return max_action * jnp.tanh(a)


# --------------------------------- main ------------------------------------ #

if __name__ == "__main__":
    # Small, module-consistent shapes.  batch is a multiple of 8 (f32 sublane).
    batch = 8
    time_frame = 5
    obs_per_frame = 16
    obs_dim = time_frame * obs_per_frame   # 80
    goal_dim = 8
    out_dim = 8
    hidden_dim = 32
    max_action = 1.0

    key = jax.random.PRNGKey(0)
    k_state, k_params = jax.random.split(key)

    state = jax.random.normal(k_state, (batch, obs_dim + goal_dim), jnp.float32)
    params = init_params(k_params, obs_per_frame, goal_dim, out_dim, hidden_dim)

    # One-time weight prep (hoisted out of the hot path).
    prepared = prepare_params(
        params, obs_dim=obs_dim, goal_dim=goal_dim, out_dim=out_dim,
        hidden_dim=hidden_dim, time_frame=time_frame)
    prepared = (jax.block_until_ready(prepared[0]), prepared[1], prepared[2])

    out = deterministic_actor_rnn_forward(state, prepared, max_action=max_action)
    out = jax.block_until_ready(out)

    ref = reference_forward(
        state, params, obs_dim=obs_dim, goal_dim=goal_dim, out_dim=out_dim,
        time_frame=time_frame, max_action=max_action)
    ref = jax.block_until_ready(ref)

    assert out.shape == (batch, out_dim)
    assert bool(jnp.allclose(out, ref, atol=2e-3, rtol=2e-3)), (
        f"mismatch: max abs err = {float(jnp.max(jnp.abs(out - ref)))}")

    print("KERNEL_OK")
</pallas_src>

<mosaic_0001>
module attributes {stable_mosaic.version = 11 : i64} {
  func.func @_actor_rnn_kernel(%arg0: memref<8x88xf32, #tpu.memory_space<vmem>>, %arg1: memref<224x80xf32, #tpu.memory_space<vmem>>, %arg2: memref<8x8xf32, #tpu.memory_space<vmem>>) attributes {dimension_semantics = [], scalar_prefetch = 0 : i64, scratch_operands = 0 : i64, tpu.core_type = #tpu.core_type<tc>} {
    %c0 = arith.constant 0 : index
    %c0_0 = arith.constant 0 : index
    %0 = vector.load %arg0[%c0, %c0_0] : memref<8x88xf32, #tpu.memory_space<vmem>>, vector<8x80xf32>
    %c0_1 = arith.constant 0 : index
    %c80 = arith.constant 80 : index
    %1 = vector.load %arg0[%c0_1, %c80] : memref<8x88xf32, #tpu.memory_space<vmem>>, vector<8x8xf32>
    %c0_2 = arith.constant 0 : index
    %c0_3 = arith.constant 0 : index
    %2 = vector.load %arg1[%c0_2, %c0_3] : memref<224x80xf32, #tpu.memory_space<vmem>>, vector<80x80xf32>
    %cst = arith.constant dense<0.000000e+00> : vector<8x80xf32>
    %3 = tpu.matmul %0, %2, %cst {dimension_numbers = #tpu.dot_dimension_numbers<[1], [0], [0], [1], [0, 0, 1, 1], [], []>} : vector<8x80xf32>, vector<80x80xf32>, vector<8x80xf32> -> vector<8x80xf32>
    %c80_4 = arith.constant 80 : index
    %c0_5 = arith.constant 0 : index
    %4 = vector.load %arg1[%c80_4, %c0_5] : memref<224x80xf32, #tpu.memory_space<vmem>>, vector<32x32xf32>
    %c112 = arith.constant 112 : index
    %c0_6 = arith.constant 0 : index
    %5 = vector.load %arg1[%c112, %c0_6] : memref<224x80xf32, #tpu.memory_space<vmem>>, vector<16x16xf32>
    %c216 = arith.constant 216 : index
    %c0_7 = arith.constant 0 : index
    %6 = vector.load %arg1[%c216, %c0_7] : memref<224x80xf32, #tpu.memory_space<vmem>>, vector<1x16xf32>
    %c217 = arith.constant 217 : index
    %c0_8 = arith.constant 0 : index
    %7 = vector.load %arg1[%c217, %c0_8] : memref<224x80xf32, #tpu.memory_space<vmem>>, vector<1x16xf32>
    %8 = vector.extract_strided_slice %3 {offsets = [0, 64], sizes = [8, 16], strides = [1, 1]} : vector<8x80xf32> to vector<8x16xf32>
    %cst_9 = arith.constant 0.000000e+00 : f32
    %9 = vector.broadcast %cst_9 : f32 to vector<8x16xf32>
    %cst_10 = arith.constant 0.000000e+00 : f32
    %10 = vector.broadcast %cst_10 : f32 to vector<8x16xf32>
    %11 = arith.addf %8, %9 : vector<8x16xf32>
    %12 = vector.broadcast %6 : vector<1x16xf32> to vector<8x16xf32>
    %13 = arith.addf %11, %12 : vector<8x16xf32>
    %14 = math.tanh %13 : vector<8x16xf32>
    %cst_11 = arith.constant dense<0.000000e+00> : vector<8x16xf32>
    %15 = tpu.matmul %14, %5, %cst_11 {dimension_numbers = #tpu.dot_dimension_numbers<[1], [0], [0], [1], [0, 0, 1, 1], [], []>} : vector<8x16xf32>, vector<16x16xf32>, vector<8x16xf32> -> vector<8x16xf32>
    %16 = arith.addf %15, %10 : vector<8x16xf32>
    %17 = vector.broadcast %7 : vector<1x16xf32> to vector<8x16xf32>
    %18 = arith.addf %16, %17 : vector<8x16xf32>
    %19 = math.tanh %18 : vector<8x16xf32>
    %20 = tpu.concatenate %14, %19 in 1 : vector<8x16xf32>, vector<8x16xf32> -> vector<8x32xf32>
    %21 = vector.extract_strided_slice %3 {offsets = [0, 48], sizes = [8, 16], strides = [1, 1]} : vector<8x80xf32> to vector<8x16xf32>
    %cst_12 = arith.constant dense<0.000000e+00> : vector<8x32xf32>
    %22 = tpu.matmul %20, %4, %cst_12 {dimension_numbers = #tpu.dot_dimension_numbers<[1], [0], [0], [1], [0, 0, 1, 1], [], []>} : vector<8x32xf32>, vector<32x32xf32>, vector<8x32xf32> -> vector<8x32xf32>
    %23 = vector.extract_strided_slice %22 {offsets = [0, 0], sizes = [8, 16], strides = [1, 1]} : vector<8x32xf32> to vector<8x16xf32>
    %24 = vector.extract_strided_slice %22 {offsets = [0, 16], sizes = [8, 16], strides = [1, 1]} : vector<8x32xf32> to vector<8x16xf32>
    %25 = arith.addf %21, %23 : vector<8x16xf32>
    %26 = vector.broadcast %6 : vector<1x16xf32> to vector<8x16xf32>
    %27 = arith.addf %25, %26 : vector<8x16xf32>
    %28 = math.tanh %27 : vector<8x16xf32>
    %cst_13 = arith.constant dense<0.000000e+00> : vector<8x16xf32>
    %29 = tpu.matmul %28, %5, %cst_13 {dimension_numbers = #tpu.dot_dimension_numbers<[1], [0], [0], [1], [0, 0, 1, 1], [], []>} : vector<8x16xf32>, vector<16x16xf32>, vector<8x16xf32> -> vector<8x16xf32>
    %30 = arith.addf %29, %24 : vector<8x16xf32>
    %31 = vector.broadcast %7 : vector<1x16xf32> to vector<8x16xf32>
    %32 = arith.addf %30, %31 : vector<8x16xf32>
    %33 = math.tanh %32 : vector<8x16xf32>
    %34 = tpu.concatenate %28, %33 in 1 : vector<8x16xf32>, vector<8x16xf32> -> vector<8x32xf32>
    %35 = vector.extract_strided_slice %3 {offsets = [0, 32], sizes = [8, 16], strides = [1, 1]} : vector<8x80xf32> to vector<8x16xf32>
    %cst_14 = arith.constant dense<0.000000e+00> : vector<8x32xf32>
    %36 = tpu.matmul %34, %4, %cst_14 {dimension_numbers = #tpu.dot_dimension_numbers<[1], [0], [0], [1], [0, 0, 1, 1], [], []>} : vector<8x32xf32>, vector<32x32xf32>, vector<8x32xf32> -> vector<8x32xf32>
    %37 = vector.extract_strided_slice %36 {offsets = [0, 0], sizes = [8, 16], strides = [1, 1]} : vector<8x32xf32> to vector<8x16xf32>
    %38 = vector.extract_strided_slice %36 {offsets = [0, 16], sizes = [8, 16], strides = [1, 1]} : vector<8x32xf32> to vector<8x16xf32>
    %39 = arith.addf %35, %37 : vector<8x16xf32>
    %40 = vector.broadcast %6 : vector<1x16xf32> to vector<8x16xf32>
    %41 = arith.addf %39, %40 : vector<8x16xf32>
    %42 = math.tanh %41 : vector<8x16xf32>
    %cst_15 = arith.constant dense<0.000000e+00> : vector<8x16xf32>
    %43 = tpu.matmul %42, %5, %cst_15 {dimension_numbers = #tpu.dot_dimension_numbers<[1], [0], [0], [1], [0, 0, 1, 1], [], []>} : vector<8x16xf32>, vector<16x16xf32>, vector<8x16xf32> -> vector<8x16xf32>
    %44 = arith.addf %43, %38 : vector<8x16xf32>
    %45 = vector.broadcast %7 : vector<1x16xf32> to vector<8x16xf32>
    %46 = arith.addf %44, %45 : vector<8x16xf32>
    %47 = math.tanh %46 : vector<8x16xf32>
    %48 = tpu.concatenate %42, %47 in 1 : vector<8x16xf32>, vector<8x16xf32> -> vector<8x32xf32>
    %49 = vector.extract_strided_slice %3 {offsets = [0, 16], sizes = [8, 16], strides = [1, 1]} : vector<8x80xf32> to vector<8x16xf32>
    %cst_16 = arith.constant dense<0.000000e+00> : vector<8x32xf32>
    %50 = tpu.matmul %48, %4, %cst_16 {dimension_numbers = #tpu.dot_dimension_numbers<[1], [0], [0], [1], [0, 0, 1, 1], [], []>} : vector<8x32xf32>, vector<32x32xf32>, vector<8x32xf32> -> vector<8x32xf32>
    %51 = vector.extract_strided_slice %50 {offsets = [0, 0], sizes = [8, 16], strides = [1, 1]} : vector<8x32xf32> to vector<8x16xf32>
    %52 = vector.extract_strided_slice %50 {offsets = [0, 16], sizes = [8, 16], strides = [1, 1]} : vector<8x32xf32> to vector<8x16xf32>
    %53 = arith.addf %49, %51 : vector<8x16xf32>
    %54 = vector.broadcast %6 : vector<1x16xf32> to vector<8x16xf32>
    %55 = arith.addf %53, %54 : vector<8x16xf32>
    %56 = math.tanh %55 : vector<8x16xf32>
    %cst_17 = arith.constant dense<0.000000e+00> : vector<8x16xf32>
    %57 = tpu.matmul %56, %5, %cst_17 {dimension_numbers = #tpu.dot_dimension_numbers<[1], [0], [0], [1], [0, 0, 1, 1], [], []>} : vector<8x16xf32>, vector<16x16xf32>, vector<8x16xf32> -> vector<8x16xf32>
    %58 = arith.addf %57, %52 : vector<8x16xf32>
    %59 = vector.broadcast %7 : vector<1x16xf32> to vector<8x16xf32>
    %60 = arith.addf %58, %59 : vector<8x16xf32>
    %61 = math.tanh %60 : vector<8x16xf32>
    %62 = tpu.concatenate %56, %61 in 1 : vector<8x16xf32>, vector<8x16xf32> -> vector<8x32xf32>
    %63 = vector.extract_strided_slice %3 {offsets = [0, 0], sizes = [8, 16], strides = [1, 1]} : vector<8x80xf32> to vector<8x16xf32>
    %cst_18 = arith.constant dense<0.000000e+00> : vector<8x32xf32>
    %64 = tpu.matmul %62, %4, %cst_18 {dimension_numbers = #tpu.dot_dimension_numbers<[1], [0], [0], [1], [0, 0, 1, 1], [], []>} : vector<8x32xf32>, vector<32x32xf32>, vector<8x32xf32> -> vector<8x32xf32>
    %65 = vector.extract_strided_slice %64 {offsets = [0, 0], sizes = [8, 16], strides = [1, 1]} : vector<8x32xf32> to vector<8x16xf32>
    %66 = vector.extract_strided_slice %64 {offsets = [0, 16], sizes = [8, 16], strides = [1, 1]} : vector<8x32xf32> to vector<8x16xf32>
    %67 = arith.addf %63, %65 : vector<8x16xf32>
    %68 = vector.broadcast %6 : vector<1x16xf32> to vector<8x16xf32>
    %69 = arith.addf %67, %68 : vector<8x16xf32>
    %70 = math.tanh %69 : vector<8x16xf32>
    %cst_19 = arith.constant dense<0.000000e+00> : vector<8x16xf32>
    %71 = tpu.matmul %70, %5, %cst_19 {dimension_numbers = #tpu.dot_dimension_numbers<[1], [0], [0], [1], [0, 0, 1, 1], [], []>} : vector<8x16xf32>, vector<16x16xf32>, vector<8x16xf32> -> vector<8x16xf32>
    %72 = arith.addf %71, %66 : vector<8x16xf32>
    %73 = vector.broadcast %7 : vector<1x16xf32> to vector<8x16xf32>
    %74 = arith.addf %72, %73 : vector<8x16xf32>
    %75 = math.tanh %74 : vector<8x16xf32>
    %c128 = arith.constant 128 : index
    %c0_20 = arith.constant 0 : index
    %76 = vector.load %arg1[%c128, %c0_20] : memref<224x80xf32, #tpu.memory_space<vmem>>, vector<16x32xf32>
    %cst_21 = arith.constant dense<0.000000e+00> : vector<8x32xf32>
    %77 = tpu.matmul %75, %76, %cst_21 {dimension_numbers = #tpu.dot_dimension_numbers<[1], [0], [0], [1], [0, 0, 1, 1], [], []>} : vector<8x16xf32>, vector<16x32xf32>, vector<8x32xf32> -> vector<8x32xf32>
    %c144 = arith.constant 144 : index
    %c0_22 = arith.constant 0 : index
    %78 = vector.load %arg1[%c144, %c0_22] : memref<224x80xf32, #tpu.memory_space<vmem>>, vector<8x32xf32>
    %cst_23 = arith.constant dense<0.000000e+00> : vector<8x32xf32>
    %79 = tpu.matmul %1, %78, %cst_23 {dimension_numbers = #tpu.dot_dimension_numbers<[1], [0], [0], [1], [0, 0, 1, 1], [], []>} : vector<8x8xf32>, vector<8x32xf32>, vector<8x32xf32> -> vector<8x32xf32>
    %80 = arith.addf %77, %79 : vector<8x32xf32>
    %c218 = arith.constant 218 : index
    %c0_24 = arith.constant 0 : index
    %81 = vector.load %arg1[%c218, %c0_24] : memref<224x80xf32, #tpu.memory_space<vmem>>, vector<1x32xf32>
    %82 = vector.broadcast %81 : vector<1x32xf32> to vector<8x32xf32>
    %83 = arith.addf %80, %82 : vector<8x32xf32>
    %cst_25 = arith.constant 0.000000e+00 : f32
    %84 = vector.broadcast %cst_25 : f32 to vector<8x32xf32>
    %85 = arith.maximumf %83, %84 : vector<8x32xf32>
    %c152 = arith.constant 152 : index
    %c0_26 = arith.constant 0 : index
    %86 = vector.load %arg1[%c152, %c0_26] : memref<224x80xf32, #tpu.memory_space<vmem>>, vector<32x32xf32>
    %cst_27 = arith.constant dense<0.000000e+00> : vector<8x32xf32>
    %87 = tpu.matmul %85, %86, %cst_27 {dimension_numbers = #tpu.dot_dimension_numbers<[1], [0], [0], [1], [0, 0, 1, 1], [], []>} : vector<8x32xf32>, vector<32x32xf32>, vector<8x32xf32> -> vector<8x32xf32>
    %c219 = arith.constant 219 : index
    %c0_28 = arith.constant 0 : index
    %88 = vector.load %arg1[%c219, %c0_28] : memref<224x80xf32, #tpu.memory_space<vmem>>, vector<1x32xf32>
    %89 = vector.broadcast %88 : vector<1x32xf32> to vector<8x32xf32>
    %90 = arith.addf %87, %89 : vector<8x32xf32>
    %cst_29 = arith.constant 0.000000e+00 : f32
    %91 = vector.broadcast %cst_29 : f32 to vector<8x32xf32>
    %92 = arith.maximumf %90, %91 : vector<8x32xf32>
    %c184 = arith.constant 184 : index
    %c0_30 = arith.constant 0 : index
    %93 = vector.load %arg1[%c184, %c0_30] : memref<224x80xf32, #tpu.memory_space<vmem>>, vector<32x8xf32>
    %cst_31 = arith.constant dense<0.000000e+00> : vector<8x8xf32>
    %94 = tpu.matmul %92, %93, %cst_31 {dimension_numbers = #tpu.dot_dimension_numbers<[1], [0], [0], [1], [0, 0, 1, 1], [], []>} : vector<8x32xf32>, vector<32x8xf32>, vector<8x8xf32> -> vector<8x8xf32>
    %c220 = arith.constant 220 : index
    %c0_32 = arith.constant 0 : index
    %95 = vector.load %arg1[%c220, %c0_32] : memref<224x80xf32, #tpu.memory_space<vmem>>, vector<1x8xf32>
    %96 = vector.broadcast %95 : vector<1x8xf32> to vector<8x8xf32>
    %97 = arith.addf %94, %96 : vector<8x8xf32>
    %98 = math.tanh %97 : vector<8x8xf32>
    %cst_33 = arith.constant 1.000000e+00 : f32
    %99 = vector.broadcast %cst_33 : f32 to vector<8x8xf32>
    %100 = arith.mulf %99, %98 : vector<8x8xf32>
    %c0_34 = arith.constant 0 : index
    %c0_35 = arith.constant 0 : index
    %101 = vector.load %arg2[%c0_34, %c0_35] : memref<8x8xf32, #tpu.memory_space<vmem>>, vector<8x8xf32>
    tpu.vector_store %arg2[%c0_34, %c0_35], %100 {strides = array<i32>} : memref<8x8xf32, #tpu.memory_space<vmem>>, vector<8x8xf32>,
    return
  }
}

</mosaic_0001>

<llo_original>
// kernel: tpu_custom_call.1
$region0: #{tpu_custom_call.1}
  #allocation0 [shape = 'u32[]', space=smem, size = 0x4, offset = 0x4, fixed_abs, tag = 'smem constant byte address 0x4 - core index']
  #allocation1 [shape = 'u32[144,128]{1,0:T(1,128)}', space=vmem, size = 0x12000, scoped, tag = 'internal scratch']
  %s0 = inlined_call_operand.vmem [shape: f32[8,88], index: 0, kind: input, shape index: {}]
  %s1 = inlined_call_operand.vmem [shape: f32[224,80], index: 1, kind: input, shape index: {}]
  %s2 = inlined_call_operand.hbm [shape: f32[8,8], index: 2, kind: output, shape index: {}]
  %s3 = sld [smem:[#allocation0]]
  $region18: #{tpu_custom_call.1} parent=0
    _
  %s5 = ssub.s32 1, %s3
  %s6 = scalar_select 0, %s5, %s3
  $region1: #{tpu_custom_call.1} parent=0
    #allocation2 [shape = 'u8[4096]{0}', space=vmem, size = 0x1000, scoped, tag = 'output window, operand 0, single buffered']
    #allocation3 [shape = 's32[1]{0}', space=sflag, size = 0x4, scoped, tag = 'scoped memory for tpu_custom_call.1']
    %7 = vsyncpa [#allocation3], 0
    // Predicated region
    $region2: #{tpu_custom_call.1} parent=1 // pred_check
      _
    $region3: #{tpu_custom_call.1} parent=1 // pred_check_branch
      %9 = sbr.rel (0) target = $region5
    $region4: #{tpu_custom_call.1} parent=1 // pred_region
      _
    $region5: #{tpu_custom_call.1} parent=1 // pred_fallthru
      _
    // Predicated region
    $region6: #{tpu_custom_call.1} parent=1 // pred_check
      _
    $region7: #{tpu_custom_call.1} parent=1 // pred_check_branch
      %11 = sbr.rel (0) target = $region9
    $region8: #{tpu_custom_call.1} parent=1 // pred_region
      _
    $region9: #{tpu_custom_call.1} parent=1 // pred_fallthru
      _
    %v12 = vld [vmem:[%s0] sm:$0xff]
    %v13 = vld [vmem:[%s1] sm:$0xff]
    %v14 = vld [vmem:[%s1 + $0x8] sm:$0xff]
    %v15 = vld [vmem:[%s1 + $0x10] sm:$0xff]
    %v16 = vld [vmem:[%s1 + $0x18] sm:$0xff]
    %v17 = vld [vmem:[%s1 + $0x20] sm:$0xff]
    %v18 = vld [vmem:[%s1 + $0x28] sm:$0xff]
    %v19 = vld [vmem:[%s1 + $0x30] sm:$0xff]
    %v20 = vld [vmem:[%s1 + $0x38] sm:$0xff]
    %v21 = vld [vmem:[%s1 + $0x40] sm:$0xff]
    %v22 = vld [vmem:[%s1 + $0x48] sm:$0xff]
    %vm23 = vcmask 654336
    %v25 = vsel %vm23, %v12, 0
    %27 = vmatprep.subr.mxu0 0.0
    %28 = vmatpush1.msra.mxu0 0.0
    %29 = vmatprep.subr.mxu0 0.0
    %30 = vmatpush1.msra.mxu0 0.0
    %31 = vmatprep.subr.mxu0 0.0
    %32 = vmatpush1.msra.mxu0 0.0
    %33 = vmatprep.subr.mxu0 0.0
    %34 = vmatpush1.msra.mxu0 0.0
    %35 = vmatprep.subr.mxu0 0.0
    %36 = vmatpush1.msra.mxu0 0.0
    %37 = vmatprep.subr.mxu0 0.0
    %38 = vmatpush1.msra.mxu0 0.0
    %39 = vmatprep.subr.mxu0 0.0
    %40 = vmatpush1.msra.mxu0 %v22
    %41 = vmatprep.subr.mxu0 0.0
    %42 = vmatpush1.msra.mxu0 %v21
    %43 = vmatprep.subr.mxu0 0.0
    %44 = vmatpush1.msra.mxu0 %v20
    %45 = vmatprep.subr.mxu0 0.0
    %46 = vmatpush1.msra.mxu0 %v19
    %47 = vmatprep.subr.mxu0 0.0
    %48 = vmatpush1.msra.mxu0 %v18
    %49 = vmatprep.subr.mxu0 0.0
    %50 = vmatpush1.msra.mxu0 %v17
    %51 = vmatprep.subr.mxu0 0.0
    %52 = vmatpush1.msra.mxu0 %v16
    %53 = vmatprep.subr.mxu0 0.0
    %54 = vmatpush1.msra.mxu0 %v15
    %55 = vmatprep.subr.mxu0 0.0
    %56 = vmatpush1.msra.mxu0 %v14
    %57 = vmatprep.subr.mxu0 0.0
    %58 = vmatpush1.msra.mxu0 %v13
    %59 = vmatprep.subr.mxu0 0.0
    %60 = vmatpush2.msra.mxu0 0.0
    %61 = vmatprep.subr.mxu0 0.0
    %62 = vmatpush2.msra.mxu0 0.0
    %63 = vmatprep.subr.mxu0 0.0
    %64 = vmatpush2.msra.mxu0 0.0
    %65 = vmatprep.subr.mxu0 0.0
    %66 = vmatpush2.msra.mxu0 0.0
    %67 = vmatprep.subr.mxu0 0.0
    %68 = vmatpush2.msra.mxu0 0.0
    %69 = vmatprep.subr.mxu0 0.0
    %70 = vmatpush2.msra.mxu0 0.0
    %71 = vmatprep.subr.mxu0 0.0
    %72 = vmatpush2.msra.mxu0 0.0
    %73 = vmatprep.subr.mxu0 0.0
    %74 = vmatpush2.msra.mxu0 0.0
    %75 = vmatprep.subr.mxu0 0.0
    %76 = vmatpush2.msra.mxu0 0.0
    %77 = vmatprep.subr.mxu0 0.0
    %78 = vmatpush2.msra.mxu0 0.0
    %79 = vmatprep.subr.mxu0 0.0
    %80 = vmatpush2.msra.mxu0 0.0
    %81 = vmatprep.subr.mxu0 0.0
    %82 = vmatpush2.msra.mxu0 0.0
    %83 = vmatprep.subr.mxu0 0.0
    %84 = vmatpush2.msra.mxu0 0.0
    %85 = vmatprep.subr.mxu0 0.0
    %86 = vmatpush2.msra.mxu0 0.0
    %87 = vmatprep.subr.mxu0 0.0
    %88 = vmatpush2.msra.mxu0 0.0
    %89 = vmatprep.subr.mxu0 0.0
    %90 = vmatpush2.msra.mxu0 0.0
    %91 = vmatprep.mubr.f32.mxu0 0.0
    %92 = vmatmul.mubr.f32.gmra.mxu0 %v25
    %v93 = vpop.f32.mrf.mxu0
    %v94 = vadd.f32 0.0, %v93
    %v95 = vpop.f32.mrf.mxu0
    %96 = vdwg.mxu0
    %v97 = vld [vmem:[%s1 + $0x50] sm:$0xff]
    %v98 = vld [vmem:[%s1 + $0x58] sm:$0xff]
    %v99 = vld [vmem:[%s1 + $0x60] sm:$0xff]
    %v100 = vld [vmem:[%s1 + $0x68] sm:$0xff]
    %v101 = vld [vmem:[%s1 + $0x70] sm:$0xff]
    %v102 = vld [vmem:[%s1 + $0x78] sm:$0xff]
    %v103 = vld [vmem:[%s1 + $0xd8] sm:$0x1]
    %v104 = vld [vmem:[%s1 + $0xd9] sm:$0x1]
    %v105 = vadd.f32 %v94, 0.0
    %v106 = vlaneseq
    %v107 = vshrl.u32 %v106, 7
    %v108 = vsub.s32 0, %v107
    %v109 = vrot.slane %v103, %v108
    %111 = vrot.lane.b32.xlu0 %v109, 64
    %v112 = vpop.permute.xlu0 %111
    %v114 = vadd.f32 %v105, %v112
    %v115 = vtanh.pop %v114
    %v116 = vlaneseq
    %v117 = vshrl.u32 %v116, 7
    %v118 = vsub.s32 0, %v117
    %v119 = vrot.slane %v104, %v118
    %121 = vrot.lane.b32.xlu0 %v115, 64
    %v122 = vpop.permute.xlu0 %121
    %vm123 = vcmask 130048
    %v124 = vsel %vm123, %v122, 0
    %126 = vmatprep.subr.mxu0 0.0
    %127 = vmatpush1.msra.mxu0 0.0
    %128 = vmatprep.subr.mxu0 0.0
    %129 = vmatpush1.msra.mxu0 0.0
    %130 = vmatprep.subr.mxu0 0.0
    %131 = vmatpush1.msra.mxu0 0.0
    %132 = vmatprep.subr.mxu0 0.0
    %133 = vmatpush1.msra.mxu0 0.0
    %134 = vmatprep.subr.mxu0 0.0
    %135 = vmatpush1.msra.mxu0 0.0
    %136 = vmatprep.subr.mxu0 0.0
    %137 = vmatpush1.msra.mxu0 0.0
    %138 = vmatprep.subr.mxu0 0.0
    %139 = vmatpush1.msra.mxu0 0.0
    %140 = vmatprep.subr.mxu0 0.0
    %141 = vmatpush1.msra.mxu0 0.0
    %142 = vmatprep.subr.mxu0 0.0
    %143 = vmatpush1.msra.mxu0 0.0
    %144 = vmatprep.subr.mxu0 0.0
    %145 = vmatpush1.msra.mxu0 0.0
    %146 = vmatprep.subr.mxu0 0.0
    %147 = vmatpush1.msra.mxu0 0.0
    %148 = vmatprep.subr.mxu0 0.0
    %149 = vmatpush1.msra.mxu0 0.0
    %150 = vmatprep.subr.mxu0 0.0
    %151 = vmatpush1.msra.mxu0 0.0
    %152 = vmatprep.subr.mxu0 0.0
    %153 = vmatpush1.msra.mxu0 0.0
    %154 = vmatprep.subr.mxu0 0.0
    %155 = vmatpush1.msra.mxu0 %v102
    %156 = vmatprep.subr.mxu0 0.0
    %157 = vmatpush1.msra.mxu0 %v101
    %158 = vmatprep.subr.mxu0 0.0
    %159 = vmatpush2.msra.mxu0 0.0
    %160 = vmatprep.subr.mxu0 0.0
    %161 = vmatpush2.msra.mxu0 0.0
    %162 = vmatprep.subr.mxu0 0.0
    %163 = vmatpush2.msra.mxu0 0.0
    %164 = vmatprep.subr.mxu0 0.0
    %165 = vmatpush2.msra.mxu0 0.0
    %166 = vmatprep.subr.mxu0 0.0
    %167 = vmatpush2.msra.mxu0 0.0
    %168 = vmatprep.subr.mxu0 0.0
    %169 = vmatpush2.msra.mxu0 0.0
    %170 = vmatprep.subr.mxu0 0.0
    %171 = vmatpush2.msra.mxu0 0.0
    %172 = vmatprep.subr.mxu0 0.0
    %173 = vmatpush2.msra.mxu0 0.0
    %174 = vmatprep.subr.mxu0 0.0
    %175 = vmatpush2.msra.mxu0 0.0
    %176 = vmatprep.subr.mxu0 0.0
    %177 = vmatpush2.msra.mxu0 0.0
    %178 = vmatprep.subr.mxu0 0.0
    %179 = vmatpush2.msra.mxu0 0.0
    %180 = vmatprep.subr.mxu0 0.0
    %181 = vmatpush2.msra.mxu0 0.0
    %182 = vmatprep.subr.mxu0 0.0
    %183 = vmatpush2.msra.mxu0 0.0
    %184 = vmatprep.subr.mxu0 0.0
    %185 = vmatpush2.msra.mxu0 0.0
    %186 = vmatprep.subr.mxu0 0.0
    %187 = vmatpush2.msra.mxu0 0.0
    %188 = vmatprep.subr.mxu0 0.0
    %189 = vmatpush2.msra.mxu0 0.0
    %190 = vmatprep.mubr.f32.mxu0 0.0
    %191 = vmatmul.mubr.f32.gmra.mxu0 %v124
    %v192 = vpop.f32.mrf.mxu0
    %v193 = vadd.f32 %v119, %v192
    %v194 = vpop.f32.mrf.mxu0
    %195 = vdwg.mxu0
    %v196 = vtanh.pop %v193
    %199 = vrot.lane.b32.xlu0 %v196, 16
    %v200 = vpop.permute.xlu0 %199
    %v202 = vsel %vm123, %v122, %v200
    %vm203 = vcmask 261120
    %v205 = vsel %vm203, %v202, 0
    %207 = vmatprep.subr.mxu0 0.0
    %208 = vmatpush1.msra.mxu0 0.0
    %209 = vmatprep.subr.mxu0 0.0
    %210 = vmatpush1.msra.mxu0 0.0
    %211 = vmatprep.subr.mxu0 0.0
    %212 = vmatpush1.msra.mxu0 0.0
    %213 = vmatprep.subr.mxu0 0.0
    %214 = vmatpush1.msra.mxu0 0.0
    %215 = vmatprep.subr.mxu0 0.0
    %216 = vmatpush1.msra.mxu0 0.0
    %217 = vmatprep.subr.mxu0 0.0
    %218 = vmatpush1.msra.mxu0 0.0
    %219 = vmatprep.subr.mxu0 0.0
    %220 = vmatpush1.msra.mxu0 0.0
    %221 = vmatprep.subr.mxu0 0.0
    %222 = vmatpush1.msra.mxu0 0.0
    %223 = vmatprep.subr.mxu0 0.0
    %224 = vmatpush1.msra.mxu0 0.0
    %225 = vmatprep.subr.mxu0 0.0
    %226 = vmatpush1.msra.mxu0 0.0
    %227 = vmatprep.subr.mxu0 0.0
    %228 = vmatpush1.msra.mxu0 0.0
    %229 = vmatprep.subr.mxu0 0.0
    %230 = vmatpush1.msra.mxu0 0.0
    %231 = vmatprep.subr.mxu0 0.0
    %232 = vmatpush1.msra.mxu0 %v100
    %233 = vmatprep.subr.mxu0 0.0
    %234 = vmatpush1.msra.mxu0 %v99
    %235 = vmatprep.subr.mxu0 0.0
    %236 = vmatpush1.msra.mxu0 %v98
    %237 = vmatprep.subr.mxu0 0.0
    %238 = vmatpush1.msra.mxu0 %v97
    %239 = vmatprep.subr.mxu0 0.0
    %240 = vmatpush2.msra.mxu0 0.0
    %241 = vmatprep.subr.mxu0 0.0
    %242 = vmatpush2.msra.mxu0 0.0
    %243 = vmatprep.subr.mxu0 0.0
    %244 = vmatpush2.msra.mxu0 0.0
    %245 = vmatprep.subr.mxu0 0.0
    %246 = vmatpush2.msra.mxu0 0.0
    %247 = vmatprep.subr.mxu0 0.0
    %248 = vmatpush2.msra.mxu0 0.0
    %249 = vmatprep.subr.mxu0 0.0
    %250 = vmatpush2.msra.mxu0 0.0
    %251 = vmatprep.subr.mxu0 0.0
    %252 = vmatpush2.msra.mxu0 0.0
    %253 = vmatprep.subr.mxu0 0.0
    %254 = vmatpush2.msra.mxu0 0.0
    %255 = vmatprep.subr.mxu0 0.0
    %256 = vmatpush2.msra.mxu0 0.0
    %257 = vmatprep.subr.mxu0 0.0
    %258 = vmatpush2.msra.mxu0 0.0
    %259 = vmatprep.subr.mxu0 0.0
    %260 = vmatpush2.msra.mxu0 0.0
    %261 = vmatprep.subr.mxu0 0.0
    %262 = vmatpush2.msra.mxu0 0.0
    %263 = vmatprep.subr.mxu0 0.0
    %264 = vmatpush2.msra.mxu0 0.0
    %265 = vmatprep.subr.mxu0 0.0
    %266 = vmatpush2.msra.mxu0 0.0
    %267 = vmatprep.subr.mxu0 0.0
    %268 = vmatpush2.msra.mxu0 0.0
    %269 = vmatprep.subr.mxu0 0.0
    %270 = vmatpush2.msra.mxu0 0.0
    %271 = vmatprep.mubr.f32.mxu0 0.0
    %272 = vmatmul.mubr.f32.gmra.mxu0 %v205
    %v273 = vpop.f32.mrf.mxu0
    %v274 = vadd.f32 0.0, %v273
    %v275 = vpop.f32.mrf.mxu0
    %276 = vdwg.mxu0
    %278 = vrot.lane.b32.xlu0 %v274, 48
    %v279 = vpop.permute.xlu0 %278
    %v281 = vadd.f32 %v94, %v279
    %282 = vrot.lane.b32.xlu0 %v109, 48
    %v283 = vpop.permute.xlu0 %282
    %v285 = vadd.f32 %v281, %v283
    %v286 = vtanh.pop %v285
    %288 = vrot.lane.b32.xlu0 %v286, 80
    %v289 = vpop.permute.xlu0 %288
    %290 = vrot.lane.b32.xlu0 %v274, 112
    %v291 = vpop.permute.xlu0 %290
    %v293 = vsel %vm123, %v289, 0
    %295 = vmatprep.subr.mxu0 0.0
    %296 = vmatpush1.msra.mxu0 0.0
    %297 = vmatprep.subr.mxu0 0.0
    %298 = vmatpush1.msra.mxu0 0.0
    %299 = vmatprep.subr.mxu0 0.0
    %300 = vmatpush1.msra.mxu0 0.0
    %301 = vmatprep.subr.mxu0 0.0
    %302 = vmatpush1.msra.mxu0 0.0
    %303 = vmatprep.subr.mxu0 0.0
    %304 = vmatpush1.msra.mxu0 0.0
    %305 = vmatprep.subr.mxu0 0.0
    %306 = vmatpush1.msra.mxu0 0.0
    %307 = vmatprep.subr.mxu0 0.0
    %308 = vmatpush1.msra.mxu0 0.0
    %309 = vmatprep.subr.mxu0 0.0
    %310 = vmatpush1.msra.mxu0 0.0
    %311 = vmatprep.subr.mxu0 0.0
    %312 = vmatpush1.msra.mxu0 0.0
    %313 = vmatprep.subr.mxu0 0.0
    %314 = vmatpush1.msra.mxu0 0.0
    %315 = vmatprep.subr.mxu0 0.0
    %316 = vmatpush1.msra.mxu0 0.0
    %317 = vmatprep.subr.mxu0 0.0
    %318 = vmatpush1.msra.mxu0 0.0
    %319 = vmatprep.subr.mxu0 0.0
    %320 = vmatpush1.msra.mxu0 0.0
    %321 = vmatprep.subr.mxu0 0.0
    %322 = vmatpush1.msra.mxu0 0.0
    %323 = vmatprep.subr.mxu0 0.0
    %324 = vmatpush1.msra.mxu0 %v102
    %325 = vmatprep.subr.mxu0 0.0
    %326 = vmatpush1.msra.mxu0 %v101
    %327 = vmatprep.subr.mxu0 0.0
    %328 = vmatpush2.msra.mxu0 0.0
    %329 = vmatprep.subr.mxu0 0.0
    %330 = vmatpush2.msra.mxu0 0.0
    %331 = vmatprep.subr.mxu0 0.0
    %332 = vmatpush2.msra.mxu0 0.0
    %333 = vmatprep.subr.mxu0 0.0
    %334 = vmatpush2.msra.mxu0 0.0
    %335 = vmatprep.subr.mxu0 0.0
    %336 = vmatpush2.msra.mxu0 0.0
    %337 = vmatprep.subr.mxu0 0.0
    %338 = vmatpush2.msra.mxu0 0.0
    %339 = vmatprep.subr.mxu0 0.0
    %340 = vmatpush2.msra.mxu0 0.0
    %341 = vmatprep.subr.mxu0 0.0
    %342 = vmatpush2.msra.mxu0 0.0
    %343 = vmatprep.subr.mxu0 0.0
    %344 = vmatpush2.msra.mxu0 0.0
    %345 = vmatprep.subr.mxu0 0.0
    %346 = vmatpush2.msra.mxu0 0.0
    %347 = vmatprep.subr.mxu0 0.0
    %348 = vmatpush2.msra.mxu0 0.0
    %349 = vmatprep.subr.mxu0 0.0
    %350 = vmatpush2.msra.mxu0 0.0
    %351 = vmatprep.subr.mxu0 0.0
    %352 = vmatpush2.msra.mxu0 0.0
    %353 = vmatprep.subr.mxu0 0.0
    %354 = vmatpush2.msra.mxu0 0.0
    %355 = vmatprep.subr.mxu0 0.0
    %356 = vmatpush2.msra.mxu0 0.0
    %357 = vmatprep.subr.mxu0 0.0
    %358 = vmatpush2.msra.mxu0 0.0
    %359 = vmatprep.mubr.f32.mxu0 0.0
    %360 = vmatmul.mubr.f32.gmra.mxu0 %v293
    %v361 = vpop.f32.mrf.mxu0
    %v362 = vadd.f32 %v291, %v361
    %v363 = vpop.f32.mrf.mxu0
    %364 = vdwg.mxu0
    %v365 = vadd.f32 %v362, %v119
    %v366 = vtanh.pop %v365
    %369 = vrot.lane.b32.xlu0 %v366, 16
    %v370 = vpop.permute.xlu0 %369
    %v372 = vsel %vm123, %v289, %v370
    %v374 = vsel %vm203, %v372, 0
    %376 = vmatprep.subr.mxu0 0.0
    %377 = vmatpush1.msra.mxu0 0.0
    %378 = vmatprep.subr.mxu0 0.0
    %379 = vmatpush1.msra.mxu0 0.0
    %380 = vmatprep.subr.mxu0 0.0
    %381 = vmatpush1.msra.mxu0 0.0
    %382 = vmatprep.subr.mxu0 0.0
    %383 = vmatpush1.msra.mxu0 0.0
    %384 = vmatprep.subr.mxu0 0.0
    %385 = vmatpush1.msra.mxu0 0.0
    %386 = vmatprep.subr.mxu0 0.0
    %387 = vmatpush1.msra.mxu0 0.0
    %388 = vmatprep.subr.mxu0 0.0
    %389 = vmatpush1.msra.mxu0 0.0
    %390 = vmatprep.subr.mxu0 0.0
    %391 = vmatpush1.msra.mxu0 0.0
    %392 = vmatprep.subr.mxu0 0.0
    %393 = vmatpush1.msra.mxu0 0.0
    %394 = vmatprep.subr.mxu0 0.0
    %395 = vmatpush1.msra.mxu0 0.0
    %396 = vmatprep.subr.mxu0 0.0
    %397 = vmatpush1.msra.mxu0 0.0
    %398 = vmatprep.subr.mxu0 0.0
    %399 = vmatpush1.msra.mxu0 0.0
    %400 = vmatprep.subr.mxu0 0.0
    %401 = vmatpush1.msra.mxu0 %v100
    %402 = vmatprep.subr.mxu0 0.0
    %403 = vmatpush1.msra.mxu0 %v99
    %404 = vmatprep.subr.mxu0 0.0
    %405 = vmatpush1.msra.mxu0 %v98
    %406 = vmatprep.subr.mxu0 0.0
    %407 = vmatpush1.msra.mxu0 %v97
    %408 = vmatprep.subr.mxu0 0.0
    %409 = vmatpush2.msra.mxu0 0.0
    %410 = vmatprep.subr.mxu0 0.0
    %411 = vmatpush2.msra.mxu0 0.0
    %412 = vmatprep.subr.mxu0 0.0
    %413 = vmatpush2.msra.mxu0 0.0
    %414 = vmatprep.subr.mxu0 0.0
    %415 = vmatpush2.msra.mxu0 0.0
    %416 = vmatprep.subr.mxu0 0.0
    %417 = vmatpush2.msra.mxu0 0.0
    %418 = vmatprep.subr.mxu0 0.0
    %419 = vmatpush2.msra.mxu0 0.0
    %420 = vmatprep.subr.mxu0 0.0
    %421 = vmatpush2.msra.mxu0 0.0
    %422 = vmatprep.subr.mxu0 0.0
    %423 = vmatpush2.msra.mxu0 0.0
    %424 = vmatprep.subr.mxu0 0.0
    %425 = vmatpush2.msra.mxu0 0.0
    %426 = vmatprep.subr.mxu0 0.0
    %427 = vmatpush2.msra.mxu0 0.0
    %428 = vmatprep.subr.mxu0 0.0
    %429 = vmatpush2.msra.mxu0 0.0
    %430 = vmatprep.subr.mxu0 0.0
    %431 = vmatpush2.msra.mxu0 0.0
    %432 = vmatprep.subr.mxu0 0.0
    %433 = vmatpush2.msra.mxu0 0.0
    %434 = vmatprep.subr.mxu0 0.0
    %435 = vmatpush2.msra.mxu0 0.0
    %436 = vmatprep.subr.mxu0 0.0
    %437 = vmatpush2.msra.mxu0 0.0
    %438 = vmatprep.subr.mxu0 0.0
    %439 = vmatpush2.msra.mxu0 0.0
    %440 = vmatprep.mubr.f32.mxu0 0.0
    %441 = vmatmul.mubr.f32.gmra.mxu0 %v374
    %v442 = vpop.f32.mrf.mxu0
    %v443 = vadd.f32 0.0, %v442
    %v444 = vpop.f32.mrf.mxu0
    %445 = vdwg.mxu0
    %447 = vrot.lane.b32.xlu0 %v443, 32
    %v448 = vpop.permute.xlu0 %447
    %v450 = vadd.f32 %v94, %v448
    %451 = vrot.lane.b32.xlu0 %v109, 32
    %v452 = vpop.permute.xlu0 %451
    %v454 = vadd.f32 %v450, %v452
    %v455 = vtanh.pop %v454
    %457 = vrot.lane.b32.xlu0 %v455, 96
    %v458 = vpop.permute.xlu0 %457
    %459 = vrot.lane.b32.xlu0 %v443, 112
    %v460 = vpop.permute.xlu0 %459
    %v462 = vsel %vm123, %v458, 0
    %464 = vmatprep.subr.mxu0 0.0
    %465 = vmatpush1.msra.mxu0 0.0
    %466 = vmatprep.subr.mxu0 0.0
    %467 = vmatpush1.msra.mxu0 0.0
    %468 = vmatprep.subr.mxu0 0.0
    %469 = vmatpush1.msra.mxu0 0.0
    %470 = vmatprep.subr.mxu0 0.0
    %471 = vmatpush1.msra.mxu0 0.0
    %472 = vmatprep.subr.mxu0 0.0
    %473 = vmatpush1.msra.mxu0 0.0
    %474 = vmatprep.subr.mxu0 0.0
    %475 = vmatpush1.msra.mxu0 0.0
    %476 = vmatprep.subr.mxu0 0.0
    %477 = vmatpush1.msra.mxu0 0.0
    %478 = vmatprep.subr.mxu0 0.0
    %479 = vmatpush1.msra.mxu0 0.0
    %480 = vmatprep.subr.mxu0 0.0
    %481 = vmatpush1.msra.mxu0 0.0
    %482 = vmatprep.subr.mxu0 0.0
    %483 = vmatpush1.msra.mxu0 0.0
    %484 = vmatprep.subr.mxu0 0.0
    %485 = vmatpush1.msra.mxu0 0.0
    %486 = vmatprep.subr.mxu0 0.0
    %487 = vmatpush1.msra.mxu0 0.0
    %488 = vmatprep.subr.mxu0 0.0
    %489 = vmatpush1.msra.mxu0 0.0
    %490 = vmatprep.subr.mxu0 0.0
    %491 = vmatpush1.msra.mxu0 0.0
    %492 = vmatprep.subr.mxu0 0.0
    %493 = vmatpush1.msra.mxu0 %v102
    %494 = vmatprep.subr.mxu0 0.0
    %495 = vmatpush1.msra.mxu0 %v101
    %496 = vmatprep.subr.mxu0 0.0
    %497 = vmatpush2.msra.mxu0 0.0
    %498 = vmatprep.subr.mxu0 0.0
    %499 = vmatpush2.msra.mxu0 0.0
    %500 = vmatprep.subr.mxu0 0.0
    %501 = vmatpush2.msra.mxu0 0.0
    %502 = vmatprep.subr.mxu0 0.0
    %503 = vmatpush2.msra.mxu0 0.0
    %504 = vmatprep.subr.mxu0 0.0
    %505 = vmatpush2.msra.mxu0 0.0
    %506 = vmatprep.subr.mxu0 0.0
    %507 = vmatpush2.msra.mxu0 0.0
    %508 = vmatprep.subr.mxu0 0.0
    %509 = vmatpush2.msra.mxu0 0.0
    %510 = vmatprep.subr.mxu0 0.0
    %511 = vmatpush2.msra.mxu0 0.0
    %512 = vmatprep.subr.mxu0 0.0
    %513 = vmatpush2.msra.mxu0 0.0
    %514 = vmatprep.subr.mxu0 0.0
    %515 = vmatpush2.msra.mxu0 0.0
    %516 = vmatprep.subr.mxu0 0.0
    %517 = vmatpush2.msra.mxu0 0.0
    %518 = vmatprep.subr.mxu0 0.0
    %519 = vmatpush2.msra.mxu0 0.0
    %520 = vmatprep.subr.mxu0 0.0
    %521 = vmatpush2.msra.mxu0 0.0
    %522 = vmatprep.subr.mxu0 0.0
    %523 = vmatpush2.msra.mxu0 0.0
    %524 = vmatprep.subr.mxu0 0.0
    %525 = vmatpush2.msra.mxu0 0.0
    %526 = vmatprep.subr.mxu0 0.0
    %527 = vmatpush2.msra.mxu0 0.0
    %528 = vmatprep.mubr.f32.mxu0 0.0
    %529 = vmatmul.mubr.f32.gmra.mxu0 %v462
    %v530 = vpop.f32.mrf.mxu0
    %v531 = vadd.f32 %v460, %v530
    %v532 = vpop.f32.mrf.mxu0
    %533 = vdwg.mxu0
    %v534 = vadd.f32 %v531, %v119
    %v535 = vtanh.pop %v534
    %538 = vrot.lane.b32.xlu0 %v535, 16
    %v539 = vpop.permute.xlu0 %538
    %v541 = vsel %vm123, %v458, %v539
    %v543 = vsel %vm203, %v541, 0
    %545 = vmatprep.subr.mxu0 0.0
    %546 = vmatpush1.msra.mxu0 0.0
    %547 = vmatprep.subr.mxu0 0.0
    %548 = vmatpush1.msra.mxu0 0.0
    %549 = vmatprep.subr.mxu0 0.0
    %550 = vmatpush1.msra.mxu0 0.0
    %551 = vmatprep.subr.mxu0 0.0
    %552 = vmatpush1.msra.mxu0 0.0
    %553 = vmatprep.subr.mxu0 0.0
    %554 = vmatpush1.msra.mxu0 0.0
    %555 = vmatprep.subr.mxu0 0.0
    %556 = vmatpush1.msra.mxu0 0.0
    %557 = vmatprep.subr.mxu0 0.0
    %558 = vmatpush1.msra.mxu0 0.0
    %559 = vmatprep.subr.mxu0 0.0
    %560 = vmatpush1.msra.mxu0 0.0
    %561 = vmatprep.subr.mxu0 0.0
    %562 = vmatpush1.msra.mxu0 0.0
    %563 = vmatprep.subr.mxu0 0.0
    %564 = vmatpush1.msra.mxu0 0.0
    %565 = vmatprep.subr.mxu0 0.0
    %566 = vmatpush1.msra.mxu0 0.0
    %567 = vmatprep.subr.mxu0 0.0
    %568 = vmatpush1.msra.mxu0 0.0
    %569 = vmatprep.subr.mxu0 0.0
    %570 = vmatpush1.msra.mxu0 %v100
    %571 = vmatprep.subr.mxu0 0.0
    %572 = vmatpush1.msra.mxu0 %v99
    %573 = vmatprep.subr.mxu0 0.0
    %574 = vmatpush1.msra.mxu0 %v98
    %575 = vmatprep.subr.mxu0 0.0
    %576 = vmatpush1.msra.mxu0 %v97
    %577 = vmatprep.subr.mxu0 0.0
    %578 = vmatpush2.msra.mxu0 0.0
    %579 = vmatprep.subr.mxu0 0.0
    %580 = vmatpush2.msra.mxu0 0.0
    %581 = vmatprep.subr.mxu0 0.0
    %582 = vmatpush2.msra.mxu0 0.0
    %583 = vmatprep.subr.mxu0 0.0
    %584 = vmatpush2.msra.mxu0 0.0
    %585 = vmatprep.subr.mxu0 0.0
    %586 = vmatpush2.msra.mxu0 0.0
    %587 = vmatprep.subr.mxu0 0.0
    %588 = vmatpush2.msra.mxu0 0.0
    %589 = vmatprep.subr.mxu0 0.0
    %590 = vmatpush2.msra.mxu0 0.0
    %591 = vmatprep.subr.mxu0 0.0
    %592 = vmatpush2.msra.mxu0 0.0
    %593 = vmatprep.subr.mxu0 0.0
    %594 = vmatpush2.msra.mxu0 0.0
    %595 = vmatprep.subr.mxu0 0.0
    %596 = vmatpush2.msra.mxu0 0.0
    %597 = vmatprep.subr.mxu0 0.0
    %598 = vmatpush2.msra.mxu0 0.0
    %599 = vmatprep.subr.mxu0 0.0
    %600 = vmatpush2.msra.mxu0 0.0
    %601 = vmatprep.subr.mxu0 0.0
    %602 = vmatpush2.msra.mxu0 0.0
    %603 = vmatprep.subr.mxu0 0.0
    %604 = vmatpush2.msra.mxu0 0.0
    %605 = vmatprep.subr.mxu0 0.0
    %606 = vmatpush2.msra.mxu0 0.0
    %607 = vmatprep.subr.mxu0 0.0
    %608 = vmatpush2.msra.mxu0 0.0
    %609 = vmatprep.mubr.f32.mxu0 0.0
    %610 = vmatmul.mubr.f32.gmra.mxu0 %v543
    %v611 = vpop.f32.mrf.mxu0
    %v612 = vadd.f32 0.0, %v611
    %v613 = vpop.f32.mrf.mxu0
    %614 = vdwg.mxu0
    %616 = vrot.lane.b32.xlu0 %v612, 16
    %v617 = vpop.permute.xlu0 %616
    %v619 = vadd.f32 %v94, %v617
    %620 = vrot.lane.b32.xlu0 %v109, 16
    %v621 = vpop.permute.xlu0 %620
    %v623 = vadd.f32 %v619, %v621
    %v624 = vtanh.pop %v623
    %626 = vrot.lane.b32.xlu0 %v624, 112
    %v627 = vpop.permute.xlu0 %626
    %628 = vrot.lane.b32.xlu0 %v612, 112
    %v629 = vpop.permute.xlu0 %628
    %v631 = vsel %vm123, %v627, 0
    %633 = vmatprep.subr.mxu0 0.0
    %634 = vmatpush1.msra.mxu0 0.0
    %635 = vmatprep.subr.mxu0 0.0
    %636 = vmatpush1.msra.mxu0 0.0
    %637 = vmatprep.subr.mxu0 0.0
    %638 = vmatpush1.msra.mxu0 0.0
    %639 = vmatprep.subr.mxu0 0.0
    %640 = vmatpush1.msra.mxu0 0.0
    %641 = vmatprep.subr.mxu0 0.0
    %642 = vmatpush1.msra.mxu0 0.0
    %643 = vmatprep.subr.mxu0 0.0
    %644 = vmatpush1.msra.mxu0 0.0
    %645 = vmatprep.subr.mxu0 0.0
    %646 = vmatpush1.msra.mxu0 0.0
    %647 = vmatprep.subr.mxu0 0.0
    %648 = vmatpush1.msra.mxu0 0.0
    %649 = vmatprep.subr.mxu0 0.0
    %650 = vmatpush1.msra.mxu0 0.0
    %651 = vmatprep.subr.mxu0 0.0
    %652 = vmatpush1.msra.mxu0 0.0
    %653 = vmatprep.subr.mxu0 0.0
    %654 = vmatpush1.msra.mxu0 0.0
    %655 = vmatprep.subr.mxu0 0.0
    %656 = vmatpush1.msra.mxu0 0.0
    %657 = vmatprep.subr.mxu0 0.0
    %658 = vmatpush1.msra.mxu0 0.0
    %659 = vmatprep.subr.mxu0 0.0
    %660 = vmatpush1.msra.mxu0 0.0
    %661 = vmatprep.subr.mxu0 0.0
    %662 = vmatpush1.msra.mxu0 %v102
    %663 = vmatprep.subr.mxu0 0.0
    %664 = vmatpush1.msra.mxu0 %v101
    %665 = vmatprep.subr.mxu0 0.0
    %666 = vmatpush2.msra.mxu0 0.0
    %667 = vmatprep.subr.mxu0 0.0
    %668 = vmatpush2.msra.mxu0 0.0
    %669 = vmatprep.subr.mxu0 0.0
    %670 = vmatpush2.msra.mxu0 0.0
    %671 = vmatprep.subr.mxu0 0.0
    %672 = vmatpush2.msra.mxu0 0.0
    %673 = vmatprep.subr.mxu0 0.0
    %674 = vmatpush2.msra.mxu0 0.0
    %675 = vmatprep.subr.mxu0 0.0
    %676 = vmatpush2.msra.mxu0 0.0
    %677 = vmatprep.subr.mxu0 0.0
    %678 = vmatpush2.msra.mxu0 0.0
    %679 = vmatprep.subr.mxu0 0.0
    %680 = vmatpush2.msra.mxu0 0.0
    %681 = vmatprep.subr.mxu0 0.0
    %682 = vmatpush2.msra.mxu0 0.0
    %683 = vmatprep.subr.mxu0 0.0
    %684 = vmatpush2.msra.mxu0 0.0
    %685 = vmatprep.subr.mxu0 0.0
    %686 = vmatpush2.msra.mxu0 0.0
    %687 = vmatprep.subr.mxu0 0.0
    %688 = vmatpush2.msra.mxu0 0.0
    %689 = vmatprep.subr.mxu0 0.0
    %690 = vmatpush2.msra.mxu0 0.0
    %691 = vmatprep.subr.mxu0 0.0
    %692 = vmatpush2.msra.mxu0 0.0
    %693 = vmatprep.subr.mxu0 0.0
    %694 = vmatpush2.msra.mxu0 0.0
    %695 = vmatprep.subr.mxu0 0.0
    %696 = vmatpush2.msra.mxu0 0.0
    %697 = vmatprep.mubr.f32.mxu0 0.0
    %698 = vmatmul.mubr.f32.gmra.mxu0 %v631
    %v699 = vpop.f32.mrf.mxu0
    %v700 = vadd.f32 %v629, %v699
    %v701 = vpop.f32.mrf.mxu0
    %702 = vdwg.mxu0
    %v703 = vadd.f32 %v700, %v119
    %v704 = vtanh.pop %v703
    %707 = vrot.lane.b32.xlu0 %v704, 16
    %v708 = vpop.permute.xlu0 %707
    %v710 = vsel %vm123, %v627, %v708
    %v712 = vsel %vm203, %v710, 0
    %714 = vmatprep.subr.mxu0 0.0
    %715 = vmatpush1.msra.mxu0 0.0
    %716 = vmatprep.subr.mxu0 0.0
    %717 = vmatpush1.msra.mxu0 0.0
    %718 = vmatprep.subr.mxu0 0.0
    %719 = vmatpush1.msra.mxu0 0.0
    %720 = vmatprep.subr.mxu0 0.0
    %721 = vmatpush1.msra.mxu0 0.0
    %722 = vmatprep.subr.mxu0 0.0
    %723 = vmatpush1.msra.mxu0 0.0
    %724 = vmatprep.subr.mxu0 0.0
    %725 = vmatpush1.msra.mxu0 0.0
    %726 = vmatprep.subr.mxu0 0.0
    %727 = vmatpush1.msra.mxu0 0.0
    %728 = vmatprep.subr.mxu0 0.0
    %729 = vmatpush1.msra.mxu0 0.0
    %730 = vmatprep.subr.mxu0 0.0
    %731 = vmatpush1.msra.mxu0 0.0
    %732 = vmatprep.subr.mxu0 0.0
    %733 = vmatpush1.msra.mxu0 0.0
    %734 = vmatprep.subr.mxu0 0.0
    %735 = vmatpush1.msra.mxu0 0.0
    %736 = vmatprep.subr.mxu0 0.0
    %737 = vmatpush1.msra.mxu0 0.0
    %738 = vmatprep.subr.mxu0 0.0
    %739 = vmatpush1.msra.mxu0 %v100
    %740 = vmatprep.subr.mxu0 0.0
    %741 = vmatpush1.msra.mxu0 %v99
    %742 = vmatprep.subr.mxu0 0.0
    %743 = vmatpush1.msra.mxu0 %v98
    %744 = vmatprep.subr.mxu0 0.0
    %745 = vmatpush1.msra.mxu0 %v97
    %746 = vmatprep.subr.mxu0 0.0
    %747 = vmatpush2.msra.mxu0 0.0
    %748 = vmatprep.subr.mxu0 0.0
    %749 = vmatpush2.msra.mxu0 0.0
    %750 = vmatprep.subr.mxu0 0.0
    %751 = vmatpush2.msra.mxu0 0.0
    %752 = vmatprep.subr.mxu0 0.0
    %753 = vmatpush2.msra.mxu0 0.0
    %754 = vmatprep.subr.mxu0 0.0
    %755 = vmatpush2.msra.mxu0 0.0
    %756 = vmatprep.subr.mxu0 0.0
    %757 = vmatpush2.msra.mxu0 0.0
    %758 = vmatprep.subr.mxu0 0.0
    %759 = vmatpush2.msra.mxu0 0.0
    %760 = vmatprep.subr.mxu0 0.0
    %761 = vmatpush2.msra.mxu0 0.0
    %762 = vmatprep.subr.mxu0 0.0
    %763 = vmatpush2.msra.mxu0 0.0
    %764 = vmatprep.subr.mxu0 0.0
    %765 = vmatpush2.msra.mxu0 0.0
    %766 = vmatprep.subr.mxu0 0.0
    %767 = vmatpush2.msra.mxu0 0.0
    %768 = vmatprep.subr.mxu0 0.0
    %769 = vmatpush2.msra.mxu0 0.0
    %770 = vmatprep.subr.mxu0 0.0
    %771 = vmatpush2.msra.mxu0 0.0
    %772 = vmatprep.subr.mxu0 0.0
    %773 = vmatpush2.msra.mxu0 0.0
    %774 = vmatprep.subr.mxu0 0.0
    %775 = vmatpush2.msra.mxu0 0.0
    %776 = vmatprep.subr.mxu0 0.0
    %777 = vmatpush2.msra.mxu0 0.0
    %778 = vmatprep.mubr.f32.mxu0 0.0
    %779 = vmatmul.mubr.f32.gmra.mxu0 %v712
    %v780 = vpop.f32.mrf.mxu0
    %v781 = vadd.f32 0.0, %v780
    %v782 = vpop.f32.mrf.mxu0
    %783 = vdwg.mxu0
    %v784 = vadd.f32 %v94, %v781
    %v785 = vadd.f32 %v784, %v109
    %v786 = vtanh.pop %v785
    %788 = vrot.lane.b32.xlu0 %v781, 112
    %v789 = vpop.permute.xlu0 %788
    %v792 = vsel %vm123, %v786, 0
    %794 = vmatprep.subr.mxu0 0.0
    %795 = vmatpush1.msra.mxu0 0.0
    %796 = vmatprep.subr.mxu0 0.0
    %797 = vmatpush1.msra.mxu0 0.0
    %798 = vmatprep.subr.mxu0 0.0
    %799 = vmatpush1.msra.mxu0 0.0
    %800 = vmatprep.subr.mxu0 0.0
    %801 = vmatpush1.msra.mxu0 0.0
    %802 = vmatprep.subr.mxu0 0.0
    %803 = vmatpush1.msra.mxu0 0.0
    %804 = vmatprep.subr.mxu0 0.0
    %805 = vmatpush1.msra.mxu0 0.0
    %806 = vmatprep.subr.mxu0 0.0
    %807 = vmatpush1.msra.mxu0 0.0
    %808 = vmatprep.subr.mxu0 0.0
    %809 = vmatpush1.msra.mxu0 0.0
    %810 = vmatprep.subr.mxu0 0.0
    %811 = vmatpush1.msra.mxu0 0.0
    %812 = vmatprep.subr.mxu0 0.0
    %813 = vmatpush1.msra.mxu0 0.0
    %814 = vmatprep.subr.mxu0 0.0
    %815 = vmatpush1.msra.mxu0 0.0
    %816 = vmatprep.subr.mxu0 0.0
    %817 = vmatpush1.msra.mxu0 0.0
    %818 = vmatprep.subr.mxu0 0.0
    %819 = vmatpush1.msra.mxu0 0.0
    %820 = vmatprep.subr.mxu0 0.0
    %821 = vmatpush1.msra.mxu0 0.0
    %822 = vmatprep.subr.mxu0 0.0
    %823 = vmatpush1.msra.mxu0 %v102
    %824 = vmatprep.subr.mxu0 0.0
    %825 = vmatpush1.msra.mxu0 %v101
    %826 = vmatprep.subr.mxu0 0.0
    %827 = vmatpush2.msra.mxu0 0.0
    %828 = vmatprep.subr.mxu0 0.0
    %829 = vmatpush2.msra.mxu0 0.0
    %830 = vmatprep.subr.mxu0 0.0
    %831 = vmatpush2.msra.mxu0 0.0
    %832 = vmatprep.subr.mxu0 0.0
    %833 = vmatpush2.msra.mxu0 0.0
    %834 = vmatprep.subr.mxu0 0.0
    %835 = vmatpush2.msra.mxu0 0.0
    %836 = vmatprep.subr.mxu0 0.0
    %837 = vmatpush2.msra.mxu0 0.0
    %838 = vmatprep.subr.mxu0 0.0
    %839 = vmatpush2.msra.mxu0 0.0
    %840 = vmatprep.subr.mxu0 0.0
    %841 = vmatpush2.msra.mxu0 0.0
    %842 = vmatprep.subr.mxu0 0.0
    %843 = vmatpush2.msra.mxu0 0.0
    %844 = vmatprep.subr.mxu0 0.0
    %845 = vmatpush2.msra.mxu0 0.0
    %846 = vmatprep.subr.mxu0 0.0
    %847 = vmatpush2.msra.mxu0 0.0
    %848 = vmatprep.subr.mxu0 0.0
    %849 = vmatpush2.msra.mxu0 0.0
    %850 = vmatprep.subr.mxu0 0.0
    %851 = vmatpush2.msra.mxu0 0.0
    %852 = vmatprep.subr.mxu0 0.0
    %853 = vmatpush2.msra.mxu0 0.0
    %854 = vmatprep.subr.mxu0 0.0
    %855 = vmatpush2.msra.mxu0 0.0
    %856 = vmatprep.subr.mxu0 0.0
    %857 = vmatpush2.msra.mxu0 0.0
    %858 = vmatprep.mubr.f32.mxu0 0.0
    %859 = vmatmul.mubr.f32.gmra.mxu0 %v792
    %v860 = vpop.f32.mrf.mxu0
    %v861 = vadd.f32 %v789, %v860
    %v862 = vpop.f32.mrf.mxu0
    %863 = vdwg.mxu0
    %v864 = vadd.f32 %v861, %v119
    %v865 = vtanh.pop %v864
    %v866 = vld [vmem:[%s1 + $0x80] sm:$0xff]
    %v867 = vld [vmem:[%s1 + $0x88] sm:$0xff]
    %v868 = vld [vmem:[%s1 + $0x90] sm:$0xff]
    %869 = vrot.lane.b32.xlu0 %v12, 48
    %v870 = vpop.permute.xlu0 %869
    %vm871 = vcmask 64512
    %v872 = vsel %vm871, %v870, 0
    %874 = vmatprep.subr.mxu0 0.0
    %875 = vmatpush1.msra.mxu0 0.0
    %876 = vmatprep.subr.mxu0 0.0
    %877 = vmatpush1.msra.mxu0 0.0
    %878 = vmatprep.subr.mxu0 0.0
    %879 = vmatpush1.msra.mxu0 0.0
    %880 = vmatprep.subr.mxu0 0.0
    %881 = vmatpush1.msra.mxu0 0.0
    %882 = vmatprep.subr.mxu0 0.0
    %883 = vmatpush1.msra.mxu0 0.0
    %884 = vmatprep.subr.mxu0 0.0
    %885 = vmatpush1.msra.mxu0 0.0
    %886 = vmatprep.subr.mxu0 0.0
    %887 = vmatpush1.msra.mxu0 0.0
    %888 = vmatprep.subr.mxu0 0.0
    %889 = vmatpush1.msra.mxu0 0.0
    %890 = vmatprep.subr.mxu0 0.0
    %891 = vmatpush1.msra.mxu0 0.0
    %892 = vmatprep.subr.mxu0 0.0
    %893 = vmatpush1.msra.mxu0 0.0
    %894 = vmatprep.subr.mxu0 0.0
    %895 = vmatpush1.msra.mxu0 0.0
    %896 = vmatprep.subr.mxu0 0.0
    %897 = vmatpush1.msra.mxu0 0.0
    %898 = vmatprep.subr.mxu0 0.0
    %899 = vmatpush1.msra.mxu0 0.0
    %900 = vmatprep.subr.mxu0 0.0
    %901 = vmatpush1.msra.mxu0 0.0
    %902 = vmatprep.subr.mxu0 0.0
    %903 = vmatpush1.msra.mxu0 0.0
    %904 = vmatprep.subr.mxu0 0.0
    %905 = vmatpush1.msra.mxu0 %v868
    %906 = vmatprep.subr.mxu0 0.0
    %907 = vmatpush2.msra.mxu0 0.0
    %908 = vmatprep.subr.mxu0 0.0
    %909 = vmatpush2.msra.mxu0 0.0
    %910 = vmatprep.subr.mxu0 0.0
    %911 = vmatpush2.msra.mxu0 0.0
    %912 = vmatprep.subr.mxu0 0.0
    %913 = vmatpush2.msra.mxu0 0.0
    %914 = vmatprep.subr.mxu0 0.0
    %915 = vmatpush2.msra.mxu0 0.0
    %916 = vmatprep.subr.mxu0 0.0
    %917 = vmatpush2.msra.mxu0 0.0
    %918 = vmatprep.subr.mxu0 0.0
    %919 = vmatpush2.msra.mxu0 0.0
    %920 = vmatprep.subr.mxu0 0.0
    %921 = vmatpush2.msra.mxu0 0.0
    %922 = vmatprep.subr.mxu0 0.0
    %923 = vmatpush2.msra.mxu0 0.0
    %924 = vmatprep.subr.mxu0 0.0
    %925 = vmatpush2.msra.mxu0 0.0
    %926 = vmatprep.subr.mxu0 0.0
    %927 = vmatpush2.msra.mxu0 0.0
    %928 = vmatprep.subr.mxu0 0.0
    %929 = vmatpush2.msra.mxu0 0.0
    %930 = vmatprep.subr.mxu0 0.0
    %931 = vmatpush2.msra.mxu0 0.0
    %932 = vmatprep.subr.mxu0 0.0
    %933 = vmatpush2.msra.mxu0 0.0
    %934 = vmatprep.subr.mxu0 0.0
    %935 = vmatpush2.msra.mxu0 0.0
    %936 = vmatprep.subr.mxu0 0.0
    %937 = vmatpush2.msra.mxu0 0.0
    %938 = vmatprep.mubr.f32.mxu0 0.0
    %939 = vmatmul.mubr.f32.gmra.mxu0 %v872
    %v940 = vpop.f32.mrf.mxu0
    %v941 = vadd.f32 0.0, %v940
    %v942 = vpop.f32.mrf.mxu0
    %943 = vdwg.mxu0
    %v945 = vsel %vm123, %v865, 0
    %947 = vmatprep.subr.mxu0 0.0
    %948 = vmatpush1.msra.mxu0 0.0
    %949 = vmatprep.subr.mxu0 0.0
    %950 = vmatpush1.msra.mxu0 0.0
    %951 = vmatprep.subr.mxu0 0.0
    %952 = vmatpush1.msra.mxu0 0.0
    %953 = vmatprep.subr.mxu0 0.0
    %954 = vmatpush1.msra.mxu0 0.0
    %955 = vmatprep.subr.mxu0 0.0
    %956 = vmatpush1.msra.mxu0 0.0
    %957 = vmatprep.subr.mxu0 0.0
    %958 = vmatpush1.msra.mxu0 0.0
    %959 = vmatprep.subr.mxu0 0.0
    %960 = vmatpush1.msra.mxu0 0.0
    %961 = vmatprep.subr.mxu0 0.0
    %962 = vmatpush1.msra.mxu0 0.0
    %963 = vmatprep.subr.mxu0 0.0
    %964 = vmatpush1.msra.mxu0 0.0
    %965 = vmatprep.subr.mxu0 0.0
    %966 = vmatpush1.msra.mxu0 0.0
    %967 = vmatprep.subr.mxu0 0.0
    %968 = vmatpush1.msra.mxu0 0.0
    %969 = vmatprep.subr.mxu0 0.0
    %970 = vmatpush1.msra.mxu0 0.0
    %971 = vmatprep.subr.mxu0 0.0
    %972 = vmatpush1.msra.mxu0 0.0
    %973 = vmatprep.subr.mxu0 0.0
    %974 = vmatpush1.msra.mxu0 0.0
    %975 = vmatprep.subr.mxu0 0.0
    %976 = vmatpush1.msra.mxu0 %v867
    %977 = vmatprep.subr.mxu0 0.0
    %978 = vmatpush1.msra.mxu0 %v866
    %979 = vmatprep.subr.mxu0 0.0
    %980 = vmatpush2.msra.mxu0 0.0
    %981 = vmatprep.subr.mxu0 0.0
    %982 = vmatpush2.msra.mxu0 0.0
    %983 = vmatprep.subr.mxu0 0.0
    %984 = vmatpush2.msra.mxu0 0.0
    %985 = vmatprep.subr.mxu0 0.0
    %986 = vmatpush2.msra.mxu0 0.0
    %987 = vmatprep.subr.mxu0 0.0
    %988 = vmatpush2.msra.mxu0 0.0
    %989 = vmatprep.subr.mxu0 0.0
    %990 = vmatpush2.msra.mxu0 0.0
    %991 = vmatprep.subr.mxu0 0.0
    %992 = vmatpush2.msra.mxu0 0.0
    %993 = vmatprep.subr.mxu0 0.0
    %994 = vmatpush2.msra.mxu0 0.0
    %995 = vmatprep.subr.mxu0 0.0
    %996 = vmatpush2.msra.mxu0 0.0
    %997 = vmatprep.subr.mxu0 0.0
    %998 = vmatpush2.msra.mxu0 0.0
    %999 = vmatprep.subr.mxu0 0.0
    %1000 = vmatpush2.msra.mxu0 0.0
    %1001 = vmatprep.subr.mxu0 0.0
    %1002 = vmatpush2.msra.mxu0 0.0
    %1003 = vmatprep.subr.mxu0 0.0
    %1004 = vmatpush2.msra.mxu0 0.0
    %1005 = vmatprep.subr.mxu0 0.0
    %1006 = vmatpush2.msra.mxu0 0.0
    %1007 = vmatprep.subr.mxu0 0.0
    %1008 = vmatpush2.msra.mxu0 0.0
    %1009 = vmatprep.subr.mxu0 0.0
    %1010 = vmatpush2.msra.mxu0 0.0
    %1011 = vmatprep.mubr.f32.mxu0 0.0
    %1012 = vmatmul.mubr.f32.gmra.mxu0 %v945
    %v1013 = vpop.f32.mrf.mxu0
    %v1014 = vadd.f32 %v941, %v1013
    %v1015 = vpop.f32.mrf.mxu0
    %1016 = vdwg.mxu0
    %v1017 = vld [vmem:[%s1 + $0xda] sm:$0x1]
    %v1018 = vlaneseq
    %v1019 = vshrl.u32 %v1018, 7
    %v1020 = vsub.s32 0, %v1019
    %v1021 = vrot.slane %v1017, %v1020
    %v1022 = vadd.f32 %v1014, %v1021
    %v1023 = vmax.f32 %v1022, 0.0
    %v1024 = vld [vmem:[%s1 + $0x98] sm:$0xff]
    %v1025 = vld [vmem:[%s1 + $0xa0] sm:$0xff]
    %v1026 = vld [vmem:[%s1 + $0xa8] sm:$0xff]
    %v1027 = vld [vmem:[%s1 + $0xb0] sm:$0xff]
    %v1028 = vld [vmem:[%s1 + $0xdb] sm:$0x1]
    %v1029 = vlaneseq
    %v1030 = vshrl.u32 %v1029, 7
    %v1031 = vsub.s32 0, %v1030
    %v1032 = vrot.slane %v1028, %v1031
    %v1034 = vsel %vm203, %v1023, 0
    %1036 = vmatprep.subr.mxu0 0.0
    %1037 = vmatpush1.msra.mxu0 0.0
    %1038 = vmatprep.subr.mxu0 0.0
    %1039 = vmatpush1.msra.mxu0 0.0
    %1040 = vmatprep.subr.mxu0 0.0
    %1041 = vmatpush1.msra.mxu0 0.0
    %1042 = vmatprep.subr.mxu0 0.0
    %1043 = vmatpush1.msra.mxu0 0.0
    %1044 = vmatprep.subr.mxu0 0.0
    %1045 = vmatpush1.msra.mxu0 0.0
    %1046 = vmatprep.subr.mxu0 0.0
    %1047 = vmatpush1.msra.mxu0 0.0
    %1048 = vmatprep.subr.mxu0 0.0
    %1049 = vmatpush1.msra.mxu0 0.0
    %1050 = vmatprep.subr.mxu0 0.0
    %1051 = vmatpush1.msra.mxu0 0.0
    %1052 = vmatprep.subr.mxu0 0.0
    %1053 = vmatpush1.msra.mxu0 0.0
    %1054 = vmatprep.subr.mxu0 0.0
    %1055 = vmatpush1.msra.mxu0 0.0
    %1056 = vmatprep.subr.mxu0 0.0
    %1057 = vmatpush1.msra.mxu0 0.0
    %1058 = vmatprep.subr.mxu0 0.0
    %1059 = vmatpush1.msra.mxu0 0.0
    %1060 = vmatprep.subr.mxu0 0.0
    %1061 = vmatpush1.msra.mxu0 %v1027
    %1062 = vmatprep.subr.mxu0 0.0
    %1063 = vmatpush1.msra.mxu0 %v1026
    %1064 = vmatprep.subr.mxu0 0.0
    %1065 = vmatpush1.msra.mxu0 %v1025
    %1066 = vmatprep.subr.mxu0 0.0
    %1067 = vmatpush1.msra.mxu0 %v1024
    %1068 = vmatprep.subr.mxu0 0.0
    %1069 = vmatpush2.msra.mxu0 0.0
    %1070 = vmatprep.subr.mxu0 0.0
    %1071 = vmatpush2.msra.mxu0 0.0
    %1072 = vmatprep.subr.mxu0 0.0
    %1073 = vmatpush2.msra.mxu0 0.0
    %1074 = vmatprep.subr.mxu0 0.0
    %1075 = vmatpush2.msra.mxu0 0.0
    %1076 = vmatprep.subr.mxu0 0.0
    %1077 = vmatpush2.msra.mxu0 0.0
    %1078 = vmatprep.subr.mxu0 0.0
    %1079 = vmatpush2.msra.mxu0 0.0
    %1080 = vmatprep.subr.mxu0 0.0
    %1081 = vmatpush2.msra.mxu0 0.0
    %1082 = vmatprep.subr.mxu0 0.0
    %1083 = vmatpush2.msra.mxu0 0.0
    %1084 = vmatprep.subr.mxu0 0.0
    %1085 = vmatpush2.msra.mxu0 0.0
    %1086 = vmatprep.subr.mxu0 0.0
    %1087 = vmatpush2.msra.mxu0 0.0
    %1088 = vmatprep.subr.mxu0 0.0
    %1089 = vmatpush2.msra.mxu0 0.0
    %1090 = vmatprep.subr.mxu0 0.0
    %1091 = vmatpush2.msra.mxu0 0.0
    %1092 = vmatprep.subr.mxu0 0.0
    %1093 = vmatpush2.msra.mxu0 0.0
    %1094 = vmatprep.subr.mxu0 0.0
    %1095 = vmatpush2.msra.mxu0 0.0
    %1096 = vmatprep.subr.mxu0 0.0
    %1097 = vmatpush2.msra.mxu0 0.0
    %1098 = vmatprep.subr.mxu0 0.0
    %1099 = vmatpush2.msra.mxu0 0.0
    %1100 = vmatprep.mubr.f32.mxu0 0.0
    %1101 = vmatmul.mubr.f32.gmra.mxu0 %v1034
    %v1102 = vpop.f32.mrf.mxu0
    %v1103 = vadd.f32 %v1032, %v1102
    %v1104 = vpop.f32.mrf.mxu0
    %1105 = vdwg.mxu0
    %v1106 = vmax.f32 %v1103, 0.0
    %v1107 = vld [vmem:[%s1 + $0xb8] sm:$0xff]
    %v1108 = vld [vmem:[%s1 + $0xc0] sm:$0xff]
    %v1109 = vld [vmem:[%s1 + $0xc8] sm:$0xff]
    %v1110 = vld [vmem:[%s1 + $0xd0] sm:$0xff]
    %v1111 = vld [vmem:[%s1 + $0xdc] sm:$0x1]
    %v1112 = vlaneseq
    %v1113 = vshrl.u32 %v1112, 7
    %v1114 = vsub.s32 0, %v1113
    %v1115 = vrot.slane %v1111, %v1114
    %v1117 = vsel %vm203, %v1106, 0
    %1119 = vmatprep.subr.mxu0 0.0
    %1120 = vmatpush1.msra.mxu0 0.0
    %1121 = vmatprep.subr.mxu0 0.0
    %1122 = vmatpush1.msra.mxu0 0.0
    %1123 = vmatprep.subr.mxu0 0.0
    %1124 = vmatpush1.msra.mxu0 0.0
    %1125 = vmatprep.subr.mxu0 0.0
    %1126 = vmatpush1.msra.mxu0 0.0
    %1127 = vmatprep.subr.mxu0 0.0
    %1128 = vmatpush1.msra.mxu0 0.0
    %1129 = vmatprep.subr.mxu0 0.0
    %1130 = vmatpush1.msra.mxu0 0.0
    %1131 = vmatprep.subr.mxu0 0.0
    %1132 = vmatpush1.msra.mxu0 0.0
    %1133 = vmatprep.subr.mxu0 0.0
    %1134 = vmatpush1.msra.mxu0 0.0
    %1135 = vmatprep.subr.mxu0 0.0
    %1136 = vmatpush1.msra.mxu0 0.0
    %1137 = vmatprep.subr.mxu0 0.0
    %1138 = vmatpush1.msra.mxu0 0.0
    %1139 = vmatprep.subr.mxu0 0.0
    %1140 = vmatpush1.msra.mxu0 0.0
    %1141 = vmatprep.subr.mxu0 0.0
    %1142 = vmatpush1.msra.mxu0 0.0
    %1143 = vmatprep.subr.mxu0 0.0
    %1144 = vmatpush1.msra.mxu0 %v1110
    %1145 = vmatprep.subr.mxu0 0.0
    %1146 = vmatpush1.msra.mxu0 %v1109
    %1147 = vmatprep.subr.mxu0 0.0
    %1148 = vmatpush1.msra.mxu0 %v1108
    %1149 = vmatprep.subr.mxu0 0.0
    %1150 = vmatpush1.msra.mxu0 %v1107
    %1151 = vmatprep.subr.mxu0 0.0
    %1152 = vmatpush2.msra.mxu0 0.0
    %1153 = vmatprep.subr.mxu0 0.0
    %1154 = vmatpush2.msra.mxu0 0.0
    %1155 = vmatprep.subr.mxu0 0.0
    %1156 = vmatpush2.msra.mxu0 0.0
    %1157 = vmatprep.subr.mxu0 0.0
    %1158 = vmatpush2.msra.mxu0 0.0
    %1159 = vmatprep.subr.mxu0 0.0
    %1160 = vmatpush2.msra.mxu0 0.0
    %1161 = vmatprep.subr.mxu0 0.0
    %1162 = vmatpush2.msra.mxu0 0.0
    %1163 = vmatprep.subr.mxu0 0.0
    %1164 = vmatpush2.msra.mxu0 0.0
    %1165 = vmatprep.subr.mxu0 0.0
    %1166 = vmatpush2.msra.mxu0 0.0
    %1167 = vmatprep.subr.mxu0 0.0
    %1168 = vmatpush2.msra.mxu0 0.0
    %1169 = vmatprep.subr.mxu0 0.0
    %1170 = vmatpush2.msra.mxu0 0.0
    %1171 = vmatprep.subr.mxu0 0.0
    %1172 = vmatpush2.msra.mxu0 0.0
    %1173 = vmatprep.subr.mxu0 0.0
    %1174 = vmatpush2.msra.mxu0 0.0
    %1175 = vmatprep.subr.mxu0 0.0
    %1176 = vmatpush2.msra.mxu0 0.0
    %1177 = vmatprep.subr.mxu0 0.0
    %1178 = vmatpush2.msra.mxu0 0.0
    %1179 = vmatprep.subr.mxu0 0.0
    %1180 = vmatpush2.msra.mxu0 0.0
    %1181 = vmatprep.subr.mxu0 0.0
    %1182 = vmatpush2.msra.mxu0 0.0
    %1183 = vmatprep.mubr.f32.mxu0 0.0
    %1184 = vmatmul.mubr.f32.gmra.mxu0 %v1117
    %v1185 = vpop.f32.mrf.mxu0
    %v1186 = vadd.f32 %v1115, %v1185
    %v1187 = vpop.f32.mrf.mxu0
    %1188 = vdwg.mxu0
    %v1189 = vtanh.pop %v1186
    %1190 = vst.msk [vmem:[#allocation2] sm:$0xff] %vm871, %v1189
    // Predicated region
    $region10: #{tpu_custom_call.1} parent=1 // pred_check
      _
    $region11: #{tpu_custom_call.1} parent=1 // pred_check_branch
      %1192 = sbr.rel (0) target = $region13
    $region12: #{tpu_custom_call.1} parent=1 // pred_region
      %s1194 = ssub.s32 128, 128
      %1195 = vsyncadd [#allocation3], %s1194
      %s1197 = sshll.u32 [#allocation2], 4
      %s1198 = int_to_ptr.vmem [resolvable:$true] %s1197
      %1200 = dma.vmem_to_hbm [thread:$0]  %s1198, 128, %s2, [#allocation3]
    $region13: #{tpu_custom_call.1} parent=1 // pred_fallthru
      _
    // Predicated region
    $region14: #{tpu_custom_call.1} parent=1 // pred_check
      _
    $region15: #{tpu_custom_call.1} parent=1 // pred_check_branch
      %1202 = sbr.rel (0) target = $region17
    $region16: #{tpu_custom_call.1} parent=1 // pred_region
      %1203 = dma.done [#allocation3], 128
    $region17: #{tpu_custom_call.1} parent=1 // pred_fallthru
      _
    %1204 = vsyncpa [#allocation3], 1

</llo_original>
